<compile_context>
chip_gen: v6e
topology: v6e:2x2x1
jax: 0.10.0
libtpu: 0.0.40
codegen_flags: <defaults>
</compile_context>

<pallas_src>
import functools
from collections import OrderedDict

import jax
import jax.numpy as jnp
from jax.experimental import pallas as pl
from jax.experimental.pallas import tpu as pltpu


# ------------------------- tiled linear (1x1 conv) ---------------------------

def _linear_kernel(x_ref, w_ref, b_ref, o_ref, *, relu: bool):
    acc = jnp.dot(x_ref[...], w_ref[...], preferred_element_type=jnp.float32)
    acc = acc + b_ref[...]
    if relu:
        acc = jnp.maximum(acc, 0.0)
    o_ref[...] = acc.astype(o_ref.dtype)


def pallas_linear(x2d, w, b, relu=False, out_dtype=jnp.bfloat16, tm=512):
    """(M,K)@(K,N)+b (+ReLU).  Grid over M rows; weights/bias stay resident."""
    M, K = x2d.shape
    N = w.shape[1]
    tm = min(tm, M)
    while M % tm:                      # keep blocks exact (M is a power of two here)
        tm //= 2
    cost = pl.CostEstimate(
        flops=2 * M * K * N,
        transcendentals=0,
        bytes_accessed=(M * K * x2d.dtype.itemsize + K * N * w.dtype.itemsize
                        + N * 4 + M * N * jnp.dtype(out_dtype).itemsize))
    return pl.pallas_call(
        functools.partial(_linear_kernel, relu=relu),
        grid=(M // tm,),
        in_specs=[
            pl.BlockSpec((tm, K), lambda i: (i, 0)),
            pl.BlockSpec((K, N), lambda i: (0, 0)),       # resident weights
            pl.BlockSpec((1, N), lambda i: (0, 0)),       # resident bias (f32)
        ],
        out_specs=pl.BlockSpec((tm, N), lambda i: (i, 0)),
        out_shape=jax.ShapeDtypeStruct((M, N), out_dtype),
        compiler_params=pltpu.CompilerParams(
            dimension_semantics=("parallel",),
            vmem_limit_bytes=32 * 1024 * 1024),
        cost_estimate=cost,
    )(x2d, w, b.reshape(1, N))


def conv1x1_nhwc(x, w, b, relu=False):
    B, H, W, Cin = x.shape
    y = pallas_linear(x.reshape(B * H * W, Cin), w, b, relu=relu)
    return y.reshape(B, H, W, -1)


# ----------------------- fused FPN level (Pallas kernel) ---------------------

def _fpn_level_kernel(*refs, w_stride, has_topdown):
    """One FPN level, one image per grid step.

    Tensors are flattened over zero-padded spatial (Hp*Wp rows, channels in
    lanes).  Does: lateral 1x1 conv (bias masked so the zero border stays zero),
    optional top-down nearest-2x upsample (constant selection matmul) + add, and
    the 3x3 layer conv as 9 shifted matmuls over a margin-padded VMEM copy.
    """
    if has_topdown:
        (f_ref, mask_ref, s_ref, prev_ref, w_in_ref, b_in_ref,
         w_ly_ref, b_ly_ref, li_ref, res_ref, xp_ref) = refs
    else:
        (f_ref, mask_ref, w_in_ref, b_in_ref,
         w_ly_ref, b_ly_ref, li_ref, res_ref, xp_ref) = refs

    n_pad = li_ref.shape[1]
    margin = w_stride + 1

    # lateral 1x1 conv (f32 accumulate); mask keeps padded border rows exactly 0
    x = jnp.dot(f_ref[0], w_in_ref[...], preferred_element_type=jnp.float32)
    x = (x + b_in_ref[...]) * mask_ref[...]
    if has_topdown:
        # nearest-2x upsample fused as a 0/1 selection matmul; border rows of S are 0
        x = x + jnp.dot(s_ref[...], prev_ref[0],
                        preferred_element_type=jnp.float32)
    li_ref[0] = x.astype(li_ref.dtype)                      # carried to next level

    # 3x3 conv: in flat row-major padded coords a (dh,dw) tap is a row offset of
    # (dh-1)*Wp + (dw-1).  Border output rows are garbage (discarded by wrapper),
    # interior rows are exact because the spatial border of `x` is zero.
    xp_ref[...] = jnp.zeros(xp_ref.shape, xp_ref.dtype)
    xp_ref[margin:margin + n_pad, :] = x
    acc = jnp.zeros(res_ref.shape[1:], jnp.float32)
    for t in range(9):
        dh, dw = divmod(t, 3)
        start = margin + (dh - 1) * w_stride + (dw - 1)
        win = xp_ref[start:start + n_pad, :].astype(jnp.bfloat16)
        acc = acc + jnp.dot(win, w_ly_ref[t],
                            preferred_element_type=jnp.float32)
    res_ref[0] = (acc + b_ly_ref[...]).astype(res_ref.dtype)


def _fpn_level(f_nhwc, prev_flat, s_up, mask, w_in, b_in, w_ly, b_ly):
    B, H, W, Cin = f_nhwc.shape
    Hp, Wp = H + 2, W + 2
    n_pad = Hp * Wp
    c_out = w_in.shape[1]
    margin = Wp + 1

    # zero-pad spatial once (cheap XLA pad), flatten to (B, Hp*Wp, Cin)
    f_pad = jnp.pad(f_nhwc, ((0, 0), (1, 1), (1, 1), (0, 0))).reshape(B, n_pad, Cin)

    has_topdown = prev_flat is not None
    arrays = [f_pad, mask]
    in_specs = [
        pl.BlockSpec((1, n_pad, Cin), lambda b: (b, 0, 0)),
        pl.BlockSpec((n_pad, 1), lambda b: (0, 0)),
    ]
    if has_topdown:
        n_prev = prev_flat.shape[1]
        arrays += [s_up, prev_flat]
        in_specs += [
            pl.BlockSpec((n_pad, n_prev), lambda b: (0, 0)),      # resident
            pl.BlockSpec((1, n_prev, c_out), lambda b: (b, 0, 0)),
        ]
    arrays += [w_in, b_in.reshape(1, c_out), w_ly, b_ly.reshape(1, c_out)]
    in_specs += [
        pl.BlockSpec((Cin, c_out), lambda b: (0, 0)),             # resident
        pl.BlockSpec((1, c_out), lambda b: (0, 0)),
        pl.BlockSpec((9, c_out, c_out), lambda b: (0, 0, 0)),     # resident
        pl.BlockSpec((1, c_out), lambda b: (0, 0)),
    ]

    li, res = pl.pallas_call(
        functools.partial(_fpn_level_kernel, w_stride=Wp, has_topdown=has_topdown),
        grid=(B,),
        in_specs=in_specs,
        out_specs=(
            pl.BlockSpec((1, n_pad, c_out), lambda b: (b, 0, 0)),
            pl.BlockSpec((1, n_pad, c_out), lambda b: (b, 0, 0)),
        ),
        out_shape=(
            jax.ShapeDtypeStruct((B, n_pad, c_out), jnp.bfloat16),   # last_inner
            jax.ShapeDtypeStruct((B, n_pad, c_out), jnp.float32),    # FPN result
        ),
        scratch_shapes=[pltpu.VMEM((n_pad + 2 * margin, c_out), jnp.float32)],
        compiler_params=pltpu.CompilerParams(
            dimension_semantics=("parallel",),
            vmem_limit_bytes=32 * 1024 * 1024),
    )(*arrays)

    result = res.reshape(B, Hp, Wp, c_out)[:, 1:-1, 1:-1, :]     # drop border rows
    return li, result


# ----------------------------- JAX glue helpers -------------------------------

def patch_merge(x, patch=2):
    """NHWC -> (B, H/p, W/p, p*p*C): transformer-style patch downsampling."""
    B, H, W, C = x.shape
    x = x.reshape(B, H // patch, patch, W // patch, patch, C)
    x = x.transpose(0, 1, 3, 2, 4, 5)
    return x.reshape(B, H // patch, W // patch, patch * patch * C)


def make_interior_mask(h, w, dtype=jnp.float32):
    hp, wp = h + 2, w + 2
    hh = jnp.arange(hp)[:, None]
    ww = jnp.arange(wp)[None, :]
    interior = (hh >= 1) & (hh <= h) & (ww >= 1) & (ww <= w)
    return interior.reshape(hp * wp, 1).astype(dtype)


def make_upsample_matrix(hf, wf, hc, wc, dtype=jnp.bfloat16):
    """Constant 0/1 matrix mapping coarse padded-flat rows -> fine padded-flat rows
    (nearest neighbour; exact for the FPN's integer 2x case)."""
    hp, wp = hf + 2, wf + 2
    wpc = wc + 2
    hh = jnp.arange(hp)[:, None]
    ww = jnp.arange(wp)[None, :]
    interior = (hh >= 1) & (hh <= hf) & (ww >= 1) & (ww <= wf)
    ys = jnp.clip((hh - 1) * hc // hf, 0, hc - 1) + 1
    xs = jnp.clip((ww - 1) * wc // wf, 0, wc - 1) + 1
    q = jnp.where(interior, ys * wpc + xs, -1).reshape(-1)
    cols = jnp.arange((hc + 2) * (wc + 2))[None, :]
    return (q[:, None] == cols).astype(dtype)


# ---------------------------- parameter creation ------------------------------

def _init_linear(key, fan_in, fan_out):
    kw, kb = jax.random.split(key)
    scale = 1.0 / (fan_in ** 0.5)
    w = jax.random.uniform(kw, (fan_in, fan_out), jnp.float32, -scale, scale)
    b = jax.random.uniform(kb, (fan_out,), jnp.float32, -scale, scale)
    return w.astype(jnp.bfloat16), b          # bf16 weights, f32 bias


def init_params(key, in_ch=4, c1=16, c2=32, c3=64, out_channels=32):
    ks = jax.random.split(key, 10)
    params = {}
    # synthetic transformer-style backbone (channels-last stages)
    params["patch_embed"] = _init_linear(ks[0], in_ch * 4, c1)   # 2x2 patchify + proj
    params["stage1"] = _init_linear(ks[1], c1, c1)
    params["stage2"] = _init_linear(ks[2], c1 * 4, c2)
    params["stage3"] = _init_linear(ks[3], c2 * 4, c3)
    # FPN: inner (1x1) and layer (3x3) blocks; biases zero like torchvision FPN
    in_channels_list = [c1, c2, c3]
    params["inner"] = []
    for i, cin in enumerate(in_channels_list):
        w, _ = _init_linear(ks[4 + i], cin, out_channels)
        params["inner"].append((w, jnp.zeros((out_channels,), jnp.float32)))
    params["layer"] = []
    for i in range(3):
        scale = 1.0 / ((9 * out_channels) ** 0.5)
        # Weight laid out (3,3,Cin,Cout) -> (9,Cin,Cout); real torchvision weights
        # (Cout,Cin,3,3) must be transposed to this layout before use.
        w = jax.random.uniform(ks[7 + i], (3, 3, out_channels, out_channels),
                               jnp.float32, -scale, scale)
        params["layer"].append(
            (w.reshape(9, out_channels, out_channels).astype(jnp.bfloat16),
             jnp.zeros((out_channels,), jnp.float32)))
    return params


# ------------------------------- forward pass ---------------------------------

def backbone_with_fpn_forward(x_nchw, params):
    # ----- body: IntermediateLayerGetter over the synthetic backbone -----
    x = jnp.transpose(x_nchw, (0, 2, 3, 1)).astype(jnp.bfloat16)   # NCHW -> NHWC
    x = patch_merge(x, 2)                                          # patch_embed
    x = conv1x1_nhwc(x, *params["patch_embed"], relu=True)

    feats = OrderedDict()
    x = conv1x1_nhwc(x, *params["stage1"], relu=True); feats["0"] = x
    x = patch_merge(x, 2)
    x = conv1x1_nhwc(x, *params["stage2"], relu=True); feats["1"] = x
    x = patch_merge(x, 2)
    x = conv1x1_nhwc(x, *params["stage3"], relu=True); feats["2"] = x
    # (the torch.permute([0,3,1,2]) of IntermediateLayerGetter is deferred to the
    #  end: the FPN convs are layout-equivalent in NHWC)

    # ----- FeaturePyramidNetwork: one fused Pallas kernel per level -----
    names = list(feats.keys())
    fs = [feats[n] for n in names]
    hw = [(f.shape[1], f.shape[2]) for f in fs]
    results = [None] * len(fs)

    last_inner = None
    for idx in range(len(fs) - 1, -1, -1):
        H, W = hw[idx]
        mask = make_interior_mask(H, W)
        if idx == len(fs) - 1:
            s_up = None
        else:
            Hc, Wc = hw[idx + 1]
            s_up = make_upsample_matrix(H, W, Hc, Wc)
        w_in, b_in = params["inner"][idx]
        w_ly, b_ly = params["layer"][idx]
        last_inner, results[idx] = _fpn_level(fs[idx], last_inner, s_up, mask,
                                              w_in, b_in, w_ly, b_ly)

    # LastLevelMaxPool: F.max_pool2d(kernel=1, stride=2) == spatial subsampling
    results.append(results[-1][:, ::2, ::2, :])
    names.append("pool")

    out = OrderedDict()
    for name, r in zip(names, results):
        out[name] = jnp.transpose(r, (0, 3, 1, 2)).astype(jnp.float32)  # -> NCHW
    return out


# ------------------------------------ main -------------------------------------

if __name__ == "__main__":
    key = jax.random.PRNGKey(0)
    k_x, k_p = jax.random.split(key)

    B, C_in, H, W = 2, 4, 16, 16
    out_channels = 32
    x = jax.random.normal(k_x, (B, C_in, H, W), jnp.float32)
    params = init_params(k_p, in_ch=C_in, c1=16, c2=32, c3=64,
                         out_channels=out_channels)

    out = backbone_with_fpn_forward(x, params)
    out = jax.block_until_ready(out)

    expected = {
        "0": (B, out_channels, 8, 8),
        "1": (B, out_channels, 4, 4),
        "2": (B, out_channels, 2, 2),
        "pool": (B, out_channels, 1, 1),
    }
    for name, shape in expected.items():
        assert out[name].shape == shape, (name, out[name].shape, shape)
        assert bool(jnp.all(jnp.isfinite(out[name])))

    print("KERNEL_OK")
</pallas_src>

<mosaic_0001>
module attributes {stable_mosaic.version = 11 : i64} {
  func.func @_linear_kernel(%arg0: i32, %arg1: memref<128x16xbf16, #tpu.memory_space<vmem>>, %arg2: memref<16x16xbf16, #tpu.memory_space<vmem>>, %arg3: memref<1x16xf32, #tpu.memory_space<vmem>>, %arg4: memref<128x16xbf16, #tpu.memory_space<vmem>>) attributes {dimension_semantics = [#tpu.dimension_semantics<parallel>], iteration_bounds = array<i64: 1>, scalar_prefetch = 0 : i64, scratch_operands = 0 : i64, tpu.core_type = #tpu.core_type<tc>, window_params = [{transform_indices = @transform_0, window_bounds = array<i64: 128, 16>}, {pipeline_mode = #tpu.pipeline_mode<synchronous>, transform_indices = @transform_1, window_bounds = array<i64: 16, 16>}, {pipeline_mode = #tpu.pipeline_mode<synchronous>, transform_indices = @transform_2, window_bounds = array<i64: 1, 16>}, {transform_indices = @transform_3, window_bounds = array<i64: 128, 16>}]} {
    %c0 = arith.constant 0 : index
    %c0_0 = arith.constant 0 : index
    %0 = vector.load %arg1[%c0, %c0_0] : memref<128x16xbf16, #tpu.memory_space<vmem>>, vector<128x16xbf16>
    %c0_1 = arith.constant 0 : index
    %c0_2 = arith.constant 0 : index
    %1 = vector.load %arg2[%c0_1, %c0_2] : memref<16x16xbf16, #tpu.memory_space<vmem>>, vector<16x16xbf16>
    %cst = arith.constant dense<0.000000e+00> : vector<128x16xf32>
    %2 = tpu.matmul %0, %1, %cst {dimension_numbers = #tpu.dot_dimension_numbers<[1], [0], [0], [1], [0, 0, 1, 1], [], []>} : vector<128x16xbf16>, vector<16x16xbf16>, vector<128x16xf32> -> vector<128x16xf32>
    %c0_3 = arith.constant 0 : index
    %c0_4 = arith.constant 0 : index
    %3 = vector.load %arg3[%c0_3, %c0_4] : memref<1x16xf32, #tpu.memory_space<vmem>>, vector<1x16xf32>
    %4 = vector.broadcast %3 : vector<1x16xf32> to vector<128x16xf32>
    %5 = arith.addf %2, %4 : vector<128x16xf32>
    %cst_5 = arith.constant 0.000000e+00 : f32
    %6 = vector.broadcast %cst_5 : f32 to vector<128x16xf32>
    %7 = arith.maximumf %5, %6 : vector<128x16xf32>
    %8 = arith.truncf %7 : vector<128x16xf32> to vector<128x16xbf16>
    %c0_6 = arith.constant 0 : index
    %c0_7 = arith.constant 0 : index
    %9 = vector.load %arg4[%c0_6, %c0_7] : memref<128x16xbf16, #tpu.memory_space<vmem>>, vector<128x16xbf16>
    tpu.vector_store %arg4[%c0_6, %c0_7], %8 {strides = array<i32>} : memref<128x16xbf16, #tpu.memory_space<vmem>>, vector<128x16xbf16>,
    return
  }
  func.func @transform_0(%arg0: i32) -> (i32, i32) {
    %c0_i32 = arith.constant 0 : i32
    %c0_i32_0 = arith.constant 0 : i32
    return %arg0, %c0_i32 : i32, i32
  }
  func.func @transform_1(%arg0: i32) -> (i32, i32) {
    %c0_i32 = arith.constant 0 : i32
    %c0_i32_0 = arith.constant 0 : i32
    %c0_i32_1 = arith.constant 0 : i32
    return %c0_i32, %c0_i32_0 : i32, i32
  }
  func.func @transform_2(%arg0: i32) -> (i32, i32) {
    %c0_i32 = arith.constant 0 : i32
    %c0_i32_0 = arith.constant 0 : i32
    %c0_i32_1 = arith.constant 0 : i32
    return %c0_i32, %c0_i32_0 : i32, i32
  }
  func.func @transform_3(%arg0: i32) -> (i32, i32) {
    %c0_i32 = arith.constant 0 : i32
    %c0_i32_0 = arith.constant 0 : i32
    return %arg0, %c0_i32 : i32, i32
  }
}

</mosaic_0001>

<llo_original>
// kernel: tpu_custom_call.1
$region0: #{tpu_custom_call.1}
  #allocation0 [shape = 'u32[]', space=smem, size = 0x4, offset = 0x4, fixed_abs, tag = 'smem constant byte address 0x4 - core index']
  #allocation1 [shape = 'u32[144,128]{1,0:T(1,128)}', space=vmem, size = 0x12000, scoped, tag = 'internal scratch']
  %s0 = inlined_call_operand.vmem [shape: bf16[128,16], index: 0, kind: input, shape index: {}]
  %s1 = inlined_call_operand.vmem [shape: bf16[16,16], index: 1, kind: input, shape index: {}]
  %s2 = inlined_call_operand.vmem [shape: f32[1,16], index: 2, kind: input, shape index: {}]
  %s3 = inlined_call_operand.vmem [shape: bf16[128,16], index: 3, kind: output, shape index: {}]
  %s4 = sld [smem:[#allocation0]]
  $region22: #{tpu_custom_call.1} parent=0
    _
  %s6 = ssub.s32 1, %s4
  %s7 = scalar_select 0, %s6, %s4
  // Predicated region
  $region2: #{tpu_custom_call.1} parent=0 // pred_check
    _
  $region3: #{tpu_custom_call.1} parent=0 // pred_check_branch
    %9 = sbr.rel (0) target = $region5
  $region4: #{tpu_custom_call.1} parent=0 // pred_region
    _
  $region5: #{tpu_custom_call.1} parent=0 // pred_fallthru
    _
  // Predicated region
  $region6: #{tpu_custom_call.1} parent=0 // pred_check
    _
  $region7: #{tpu_custom_call.1} parent=0 // pred_check_branch
    %11 = sbr.rel (0) target = $region9
  $region8: #{tpu_custom_call.1} parent=0 // pred_region
    _
  $region9: #{tpu_custom_call.1} parent=0 // pred_fallthru
    _
  // Predicated region
  $region10: #{tpu_custom_call.1} parent=0 // pred_check
    _
  $region11: #{tpu_custom_call.1} parent=0 // pred_check_branch
    %13 = sbr.rel (0) target = $region13
  $region12: #{tpu_custom_call.1} parent=0 // pred_region
    _
  $region13: #{tpu_custom_call.1} parent=0 // pred_fallthru
    _
  %v15 = vld [vmem:[%s0] sm:$0xf]
  %v16 = vld [vmem:[%s0 + $0x4] sm:$0xf]
  %v17 = vld [vmem:[%s0 + $0x8] sm:$0xf]
  %v18 = vld [vmem:[%s0 + $0xc] sm:$0xf]
  %v19 = vld [vmem:[%s0 + $0x10] sm:$0xf]
  %v20 = vld [vmem:[%s0 + $0x14] sm:$0xf]
  %v21 = vld [vmem:[%s0 + $0x18] sm:$0xf]
  %v22 = vld [vmem:[%s0 + $0x1c] sm:$0xf]
  %v23 = vld [vmem:[%s0 + $0x20] sm:$0xf]
  %v24 = vld [vmem:[%s0 + $0x24] sm:$0xf]
  %v25 = vld [vmem:[%s0 + $0x28] sm:$0xf]
  %v26 = vld [vmem:[%s0 + $0x2c] sm:$0xf]
  %v27 = vld [vmem:[%s0 + $0x30] sm:$0xf]
  %v28 = vld [vmem:[%s0 + $0x34] sm:$0xf]
  %v29 = vld [vmem:[%s0 + $0x38] sm:$0xf]
  %v30 = vld [vmem:[%s0 + $0x3c] sm:$0xf]
  %v31 = vld [vmem:[%s1] sm:$0xf]
  %v32 = vld [vmem:[%s1 + $0x4] sm:$0xf]
  %v33 = vld [vmem:[%s2] sm:$0x1]
  %v35 = vlaneseq
  %v36 = vshrl.u32 %v35, 7
  %v37 = vsub.s32 0, %v36
  %v38 = vrot.slane %v33, %v37
  %v56 = vunpack.c.l.b16 %v15
  %v57 = vunpack.c.l.b16 %v16
  %v58 = vunpack.c.l.b16 %v17
  %v59 = vunpack.c.l.b16 %v18
  %v60 = vunpack.c.l.b16 %v19
  %v61 = vunpack.c.l.b16 %v20
  %v62 = vunpack.c.l.b16 %v21
  %v63 = vunpack.c.l.b16 %v22
  %v64 = vunpack.c.l.b16 %v23
  %v65 = vunpack.c.l.b16 %v24
  %v66 = vunpack.c.l.b16 %v25
  %v67 = vunpack.c.l.b16 %v26
  %v68 = vunpack.c.l.b16 %v27
  %v69 = vunpack.c.l.b16 %v28
  %v70 = vunpack.c.l.b16 %v29
  %v71 = vunpack.c.l.b16 %v30
  %v72 = vpack.c.b16 %v57, %v56
  %v73 = vpack.c.b16 %v59, %v58
  %v74 = vpack.c.b16 %v61, %v60
  %v75 = vpack.c.b16 %v63, %v62
  %v76 = vpack.c.b16 %v65, %v64
  %v77 = vpack.c.b16 %v67, %v66
  %v78 = vpack.c.b16 %v69, %v68
  %v79 = vpack.c.b16 %v71, %v70
  %v82 = vunpack.c.l.b16 %v31
  %v83 = vunpack.c.l.b16 %v32
  %v84 = vpack.c.b16 %v83, %v82
  %vm86 = vcmask 130048
  %v88 = vsel %vm86, %v72, 0
  %v91 = vsel %vm86, %v73, 0
  %v94 = vsel %vm86, %v74, 0
  %v97 = vsel %vm86, %v75, 0
  %v100 = vsel %vm86, %v76, 0
  %v103 = vsel %vm86, %v77, 0
  %v106 = vsel %vm86, %v78, 0
  %v109 = vsel %vm86, %v79, 0
  %111 = vmatprep.subr.bf16.mxu0 0
  %112 = vmatpush1.bf16.msra.mxu0 0
  %113 = vmatprep.subr.bf16.mxu0 0
  %114 = vmatpush1.bf16.msra.mxu0 0
  %115 = vmatprep.subr.bf16.mxu0 0
  %116 = vmatpush1.bf16.msra.mxu0 0
  %117 = vmatprep.subr.bf16.mxu0 0
  %118 = vmatpush1.bf16.msra.mxu0 0
  %119 = vmatprep.subr.bf16.mxu0 0
  %120 = vmatpush1.bf16.msra.mxu0 0
  %121 = vmatprep.subr.bf16.mxu0 0
  %122 = vmatpush1.bf16.msra.mxu0 0
  %123 = vmatprep.subr.bf16.mxu0 0
  %124 = vmatpush1.bf16.msra.mxu0 0
  %125 = vmatprep.subr.bf16.mxu0 0
  %126 = vmatpush1.bf16.msra.mxu0 %v84
  %127 = vmatprep.subr.bf16.mxu0 0
  %128 = vmatpush2.bf16.msra.mxu0 0
  %129 = vmatprep.subr.bf16.mxu0 0
  %130 = vmatpush2.bf16.msra.mxu0 0
  %131 = vmatprep.subr.bf16.mxu0 0
  %132 = vmatpush2.bf16.msra.mxu0 0
  %133 = vmatprep.subr.bf16.mxu0 0
  %134 = vmatpush2.bf16.msra.mxu0 0
  %135 = vmatprep.subr.bf16.mxu0 0
  %136 = vmatpush2.bf16.msra.mxu0 0
  %137 = vmatprep.subr.bf16.mxu0 0
  %138 = vmatpush2.bf16.msra.mxu0 0
  %139 = vmatprep.subr.bf16.mxu0 0
  %140 = vmatpush2.bf16.msra.mxu0 0
  %141 = vmatprep.subr.bf16.mxu0 0
  %142 = vmatpush2.bf16.msra.mxu0 0
  %143 = vmatprep.mubr.bf16.mxu0 0
  %144 = vmatmul.mubr.bf16.gmra.mxu0 %v88
  %v145 = vpop.f32.mrf.mxu0
  %v146 = vadd.f32 %v38, %v145
  %v147 = vpop.f32.mrf.mxu0
  %v148 = vpop.f32.mrf.mxu0
  %v149 = vadd.f32 %v38, %v148
  %v150 = vpop.f32.mrf.mxu0
  %151 = vmatprep.mubr.bf16.mxu0 0
  %152 = vmatmul.mubr.bf16.gmra.mxu0 %v91
  %v153 = vpop.f32.mrf.mxu0
  %v154 = vadd.f32 %v38, %v153
  %v155 = vpop.f32.mrf.mxu0
  %v156 = vpop.f32.mrf.mxu0
  %v157 = vadd.f32 %v38, %v156
  %v158 = vpop.f32.mrf.mxu0
  %159 = vmatprep.mubr.bf16.mxu0 0
  %160 = vmatmul.mubr.bf16.gmra.mxu0 %v94
  %v161 = vpop.f32.mrf.mxu0
  %v162 = vadd.f32 %v38, %v161
  %v163 = vpop.f32.mrf.mxu0
  %v164 = vpop.f32.mrf.mxu0
  %v165 = vadd.f32 %v38, %v164
  %v166 = vpop.f32.mrf.mxu0
  %167 = vmatprep.mubr.bf16.mxu0 0
  %168 = vmatmul.mubr.bf16.gmra.mxu0 %v97
  %v169 = vpop.f32.mrf.mxu0
  %v170 = vadd.f32 %v38, %v169
  %v171 = vpop.f32.mrf.mxu0
  %v172 = vpop.f32.mrf.mxu0
  %v173 = vadd.f32 %v38, %v172
  %v174 = vpop.f32.mrf.mxu0
  %175 = vmatprep.mubr.bf16.mxu0 0
  %176 = vmatmul.mubr.bf16.gmra.mxu0 %v100
  %v177 = vpop.f32.mrf.mxu0
  %v178 = vadd.f32 %v38, %v177
  %v179 = vpop.f32.mrf.mxu0
  %v180 = vpop.f32.mrf.mxu0
  %v181 = vadd.f32 %v38, %v180
  %v182 = vpop.f32.mrf.mxu0
  %183 = vmatprep.mubr.bf16.mxu0 0
  %184 = vmatmul.mubr.bf16.gmra.mxu0 %v103
  %v185 = vpop.f32.mrf.mxu0
  %v186 = vadd.f32 %v38, %v185
  %v187 = vpop.f32.mrf.mxu0
  %v188 = vpop.f32.mrf.mxu0
  %v189 = vadd.f32 %v38, %v188
  %v190 = vpop.f32.mrf.mxu0
  %191 = vmatprep.mubr.bf16.mxu0 0
  %192 = vmatmul.mubr.bf16.gmra.mxu0 %v106
  %v193 = vpop.f32.mrf.mxu0
  %v194 = vadd.f32 %v38, %v193
  %v195 = vpop.f32.mrf.mxu0
  %v196 = vpop.f32.mrf.mxu0
  %v197 = vadd.f32 %v38, %v196
  %v198 = vpop.f32.mrf.mxu0
  %199 = vmatprep.mubr.bf16.mxu0 0
  %200 = vmatmul.mubr.bf16.gmra.mxu0 %v109
  %v201 = vpop.f32.mrf.mxu0
  %v202 = vadd.f32 %v38, %v201
  %v203 = vpop.f32.mrf.mxu0
  %v204 = vpop.f32.mrf.mxu0
  %v205 = vadd.f32 %v38, %v204
  %v206 = vpop.f32.mrf.mxu0
  %207 = vdwg.mxu0
  %v208 = vmax.f32 %v146, 0.0
  %v209 = vmax.f32 %v149, 0.0
  %v210 = vmax.f32 %v154, 0.0
  %v211 = vmax.f32 %v157, 0.0
  %v212 = vmax.f32 %v162, 0.0
  %v213 = vmax.f32 %v165, 0.0
  %v214 = vmax.f32 %v170, 0.0
  %v215 = vmax.f32 %v173, 0.0
  %v216 = vmax.f32 %v178, 0.0
  %v217 = vmax.f32 %v181, 0.0
  %v218 = vmax.f32 %v186, 0.0
  %v219 = vmax.f32 %v189, 0.0
  %v220 = vmax.f32 %v194, 0.0
  %v221 = vmax.f32 %v197, 0.0
  %v222 = vmax.f32 %v202, 0.0
  %v223 = vmax.f32 %v205, 0.0
  %v224 = vpack.c.bf16 %v209, %v208
  %v225 = vpack.c.bf16 %v211, %v210
  %v226 = vpack.c.bf16 %v213, %v212
  %v227 = vpack.c.bf16 %v215, %v214
  %v228 = vpack.c.bf16 %v217, %v216
  %v229 = vpack.c.bf16 %v219, %v218
  %v230 = vpack.c.bf16 %v221, %v220
  %v231 = vpack.c.bf16 %v223, %v222
  %v240 = vunpack.c.l.b16 %v224
  %v241 = vunpack.c.h.b16 %v224
  %v242 = vunpack.c.l.b16 %v225
  %v243 = vunpack.c.h.b16 %v225
  %v244 = vunpack.c.l.b16 %v226
  %v245 = vunpack.c.h.b16 %v226
  %v246 = vunpack.c.l.b16 %v227
  %v247 = vunpack.c.h.b16 %v227
  %v248 = vunpack.c.l.b16 %v228
  %v249 = vunpack.c.h.b16 %v228
  %v250 = vunpack.c.l.b16 %v229
  %v251 = vunpack.c.h.b16 %v229
  %v252 = vunpack.c.l.b16 %v230
  %v253 = vunpack.c.h.b16 %v230
  %v254 = vunpack.c.l.b16 %v231
  %v255 = vunpack.c.h.b16 %v231
  %v256 = vpack.c.b16 %v240, %v240
  %v257 = vpack.c.b16 %v241, %v241
  %v258 = vpack.c.b16 %v242, %v242
  %v259 = vpack.c.b16 %v243, %v243
  %v260 = vpack.c.b16 %v244, %v244
  %v261 = vpack.c.b16 %v245, %v245
  %v262 = vpack.c.b16 %v246, %v246
  %v263 = vpack.c.b16 %v247, %v247
  %v264 = vpack.c.b16 %v248, %v248
  %v265 = vpack.c.b16 %v249, %v249
  %v266 = vpack.c.b16 %v250, %v250
  %v267 = vpack.c.b16 %v251, %v251
  %v268 = vpack.c.b16 %v252, %v252
  %v269 = vpack.c.b16 %v253, %v253
  %v270 = vpack.c.b16 %v254, %v254
  %v271 = vpack.c.b16 %v255, %v255
  %vm288 = vcmask 125952
  %289 = vst.msk [vmem:[%s3] sm:$0xf] %vm288, %v256
  %290 = vst.msk [vmem:[%s3 + $0x4] sm:$0xf] %vm288, %v257
  %291 = vst.msk [vmem:[%s3 + $0x8] sm:$0xf] %vm288, %v258
  %292 = vst.msk [vmem:[%s3 + $0xc] sm:$0xf] %vm288, %v259
  %293 = vst.msk [vmem:[%s3 + $0x10] sm:$0xf] %vm288, %v260
  %294 = vst.msk [vmem:[%s3 + $0x14] sm:$0xf] %vm288, %v261
  %295 = vst.msk [vmem:[%s3 + $0x18] sm:$0xf] %vm288, %v262
  %296 = vst.msk [vmem:[%s3 + $0x1c] sm:$0xf] %vm288, %v263
  %297 = vst.msk [vmem:[%s3 + $0x20] sm:$0xf] %vm288, %v264
  %298 = vst.msk [vmem:[%s3 + $0x24] sm:$0xf] %vm288, %v265
  %299 = vst.msk [vmem:[%s3 + $0x28] sm:$0xf] %vm288, %v266
  %300 = vst.msk [vmem:[%s3 + $0x2c] sm:$0xf] %vm288, %v267
  %301 = vst.msk [vmem:[%s3 + $0x30] sm:$0xf] %vm288, %v268
  %302 = vst.msk [vmem:[%s3 + $0x34] sm:$0xf] %vm288, %v269
  %303 = vst.msk [vmem:[%s3 + $0x38] sm:$0xf] %vm288, %v270
  %304 = vst.msk [vmem:[%s3 + $0x3c] sm:$0xf] %vm288, %v271
  // Predicated region
  $region14: #{tpu_custom_call.1} parent=0 // pred_check
    _
  $region15: #{tpu_custom_call.1} parent=0 // pred_check_branch
    %306 = sbr.rel (0) target = $region17
  $region16: #{tpu_custom_call.1} parent=0 // pred_region
    _
  $region17: #{tpu_custom_call.1} parent=0 // pred_fallthru
    _
  // Predicated region
  $region18: #{tpu_custom_call.1} parent=0 // pred_check
    _
  $region19: #{tpu_custom_call.1} parent=0 // pred_check_branch
    %308 = sbr.rel (0) target = $region21
  $region20: #{tpu_custom_call.1} parent=0 // pred_region
    _
  $region21: #{tpu_custom_call.1} parent=0 // pred_fallthru
    _

</llo_original>
